<compile_context>
chip_gen: v5e
topology: v5e:2x2
jax: 0.10.0
libtpu: 0.0.40
codegen_flags: <defaults>
</compile_context>

<pallas_src>
import jax
import jax.numpy as jnp
from jax import lax
from jax.experimental import pallas as pl
from jax.experimental.pallas import tpu as pltpu


def bert_embedding_kernel(w_ids_ref, p_ids_ref,            # SMEM scalar-prefetch ids
                          sent_blk_ref,                     # (TM, 1) int32 VMEM block
                          word_hbm_ref,                     # (V, H) HBM (pl.ANY)
                          pos_tab_ref, sent_tab_ref,        # small tables, VMEM resident
                          gamma_ref, beta_ref,              # (1, H) VMEM resident
                          o_ref,                            # (TM, H) f32 output block
                          gather_buf, acc_buf, dma_sem):    # scratch
    tm, h = o_ref.shape
    base = pl.program_id(0) * tm

    # 1) Issue one row DMA per token from the HBM word table (real gather).
    #    In the same scalar loop, gather position rows from the small
    #    VMEM-resident position table so it overlaps with the DMAs in flight.
    @pl.loop(0, tm)
    def _(i):
        wid = w_ids_ref[base + i]
        pltpu.make_async_copy(word_hbm_ref.at[pl.ds(wid, 1), :],
                              gather_buf.at[pl.ds(i, 1), :],
                              dma_sem).start()
        pid = p_ids_ref[base + i]
        acc_buf[i, :] = pos_tab_ref[pid, :]

    # 2) Sentence embedding: type_vocab_size is tiny -> VPU select chain.
    sent = sent_blk_ref[...]                                   # (tm, 1) int32
    sent_e = jnp.zeros((tm, h), jnp.float32)
    for t in range(sent_tab_ref.shape[0]):
        row = jnp.broadcast_to(sent_tab_ref[t:t + 1, :], (tm, h))
        sent_e = jnp.where(jnp.broadcast_to(sent == t, (tm, h)), row, sent_e)

    # 3) Wait for all word-row gather DMAs of this tile.
    @pl.loop(0, tm)
    def _(i):
        pltpu.make_async_copy(word_hbm_ref.at[pl.ds(0, 1), :],
                              gather_buf.at[pl.ds(i, 1), :],
                              dma_sem).wait()

    e = gather_buf[...].astype(jnp.float32) + acc_buf[...] + sent_e

    # 4) Fused LayerNorm (eps=1e-5): single-pass stats (sum and sum-of-squares).
    s1 = jnp.sum(e, axis=-1, keepdims=True)
    s2 = jnp.sum(e * e, axis=-1, keepdims=True)
    mean = s1 * (1.0 / h)
    var = jnp.maximum(s2 * (1.0 / h) - mean * mean, 0.0)
    inv = lax.rsqrt(var + 1e-5)
    out = (e - mean) * inv * gamma_ref[...] + beta_ref[...]

    # TODO(synk): nn.Dropout implemented as eval-mode identity; a training-mode
    # mask would use pltpu.prng_seed / pltpu.prng_random_bits.
    o_ref[...] = out.astype(o_ref.dtype)


def bert_embedding(x, pos_ids, sent_ids, word_tab, pos_tab, sent_tab,
                   gamma, beta, *, tm=256):
    B, L = x.shape
    V, H = word_tab.shape
    N = B * L

    # Tile size over the flattened token axis (multiple of 8 sublanes).
    tm = max(8, min(tm, ((N + 7) // 8) * 8))
    tm = ((tm + 7) // 8) * 8
    n_pad = pl.cdiv(N, tm) * tm
    grid = (n_pad // tm,)
    pad = n_pad - N

    # ids padded with 0 (padding_idx row, always valid); padded rows sliced off.
    w_ids = jnp.pad(x.reshape(N).astype(jnp.int32), (0, pad))
    p_ids = jnp.pad(pos_ids.reshape(N).astype(jnp.int32), (0, pad))
    s_col = jnp.pad(sent_ids.reshape(N).astype(jnp.int32), (0, pad)).reshape(n_pad, 1)

    g2 = gamma.reshape(1, H).astype(jnp.float32)
    b2 = beta.reshape(1, H).astype(jnp.float32)

    grid_spec = pltpu.PrefetchScalarGridSpec(
        num_scalar_prefetch=2,                               # word ids, pos ids -> SMEM
        grid=grid,
        in_specs=[
            pl.BlockSpec((tm, 1), lambda i, *_: (i, 0)),     # sentence ids (per tile)
            pl.BlockSpec(memory_space=pl.ANY),               # word table stays in HBM
            pl.BlockSpec(pos_tab.shape, lambda i, *_: (0, 0)),   # pos table resident
            pl.BlockSpec(sent_tab.shape, lambda i, *_: (0, 0)),  # sent table resident
            pl.BlockSpec((1, H), lambda i, *_: (0, 0)),      # gamma resident
            pl.BlockSpec((1, H), lambda i, *_: (0, 0)),      # beta resident
        ],
        out_specs=pl.BlockSpec((tm, H), lambda i, *_: (i, 0)),
        scratch_shapes=[
            pltpu.VMEM((tm, H), word_tab.dtype),             # gathered word rows
            pltpu.VMEM((tm, H), jnp.float32),                # pos accumulation
            pltpu.SemaphoreType.DMA,                         # gather DMA semaphore
        ],
    )

    out = pl.pallas_call(
        bert_embedding_kernel,
        out_shape=jax.ShapeDtypeStruct((n_pad, H), jnp.float32),
        grid_spec=grid_spec,
        compiler_params=pltpu.CompilerParams(
            dimension_semantics=("parallel",)),              # shard tiles across TCs
    )(w_ids, p_ids, s_col,
      word_tab.astype(jnp.float32), pos_tab.astype(jnp.float32),
      sent_tab.astype(jnp.float32), g2, b2)

    return out[:N].reshape(B, L, H)


def reference(x, pos_ids, sent_ids, word_tab, pos_tab, sent_tab, gamma, beta):
    e = word_tab[x] + pos_tab[pos_ids] + sent_tab[sent_ids]
    mean = jnp.mean(e, axis=-1, keepdims=True)
    var = jnp.mean((e - mean) ** 2, axis=-1, keepdims=True)
    return (e - mean) * lax.rsqrt(var + 1e-5) * gamma + beta


if __name__ == "__main__":
    # Module hyperparams (small, consistent with BertEmbedding.__init__)
    vocab_size = 512
    type_vocab_size = 2
    maxlen = 64
    hidden_units = 128
    B, L = 4, 64            # N = 256 tokens -> grid of 4 tiles with tm=64

    key = jax.random.PRNGKey(0)
    k1, k2, k3, k4, k5 = jax.random.split(key, 5)

    # nn.Embedding default init ~ N(0,1); padding_idx=0 zeroes row 0.
    word_tab = jax.random.normal(k1, (vocab_size, hidden_units), jnp.float32).at[0].set(0.0)
    pos_tab = jax.random.normal(k2, (maxlen, hidden_units), jnp.float32).at[0].set(0.0)
    sent_tab = jax.random.normal(k3, (type_vocab_size, hidden_units), jnp.float32).at[0].set(0.0)
    gamma = jnp.ones((hidden_units,), jnp.float32)    # nn.LayerNorm default weight
    beta = jnp.zeros((hidden_units,), jnp.float32)    # nn.LayerNorm default bias

    x = jax.random.randint(k4, (B, L), 0, vocab_size, dtype=jnp.int32)
    pos_ids = jnp.broadcast_to(jnp.arange(L, dtype=jnp.int32), (B, L))
    sent_ids = jax.random.randint(k5, (B, L), 0, type_vocab_size, dtype=jnp.int32)

    out = bert_embedding(x, pos_ids, sent_ids, word_tab, pos_tab, sent_tab,
                         gamma, beta, tm=64)
    out = jax.block_until_ready(out)

    ref = reference(x, pos_ids, sent_ids, word_tab, pos_tab, sent_tab, gamma, beta)
    assert out.shape == (B, L, hidden_units)
    # one-pass LN stats differ from the two-pass reference at ~1e-6 abs; keep a
    # slightly looser atol than rtol.
    assert jnp.allclose(out, ref, rtol=1e-5, atol=1e-4), float(jnp.max(jnp.abs(out - ref)))

    print("KERNEL_OK")
</pallas_src>

<mosaic_0001>
module attributes {stable_mosaic.version = 11 : i64} {
  func.func @bert_embedding_kernel(%arg0: i32, %arg1: memref<256xi32, #tpu.memory_space<smem>>, %arg2: memref<256xi32, #tpu.memory_space<smem>>, %arg3: memref<64x1xi32, #tpu.memory_space<vmem>>, %arg4: memref<512x128xf32, #tpu.memory_space<any>>, %arg5: memref<64x128xf32, #tpu.memory_space<vmem>>, %arg6: memref<2x128xf32, #tpu.memory_space<vmem>>, %arg7: memref<1x128xf32, #tpu.memory_space<vmem>>, %arg8: memref<1x128xf32, #tpu.memory_space<vmem>>, %arg9: memref<64x128xf32, #tpu.memory_space<vmem>>, %arg10: memref<64x128xf32, #tpu.memory_space<vmem>>, %arg11: memref<64x128xf32, #tpu.memory_space<vmem>>, %arg12: memref<!tpu.dma_semaphore, #tpu.memory_space<semaphore_mem>>) attributes {dimension_semantics = [#tpu.dimension_semantics<parallel>], iteration_bounds = array<i64: 4>, scalar_prefetch = 2 : i64, scratch_operands = 3 : i64, tpu.core_type = #tpu.core_type<tc>, window_params = [{transform_indices = @transform_0, window_bounds = array<i64: 64, 1>}, {}, {pipeline_mode = #tpu.pipeline_mode<synchronous>, transform_indices = @transform_2, window_bounds = array<i64: 64, 128>}, {pipeline_mode = #tpu.pipeline_mode<synchronous>, transform_indices = @transform_3, window_bounds = array<i64: 2, 128>}, {pipeline_mode = #tpu.pipeline_mode<synchronous>, transform_indices = @transform_4, window_bounds = array<i64: 1, 128>}, {pipeline_mode = #tpu.pipeline_mode<synchronous>, transform_indices = @transform_5, window_bounds = array<i64: 1, 128>}, {transform_indices = @transform_6, window_bounds = array<i64: 64, 128>}]} {
    %c64_i32 = arith.constant 64 : i32
    %0 = arith.muli %arg0, %c64_i32 : i32
    %c0_i32 = arith.constant 0 : i32
    %c64_i32_0 = arith.constant 64 : i32
    %1 = arith.addi %c0_i32, %c64_i32_0 : i32
    %c1_i32 = arith.constant 1 : i32
    scf.for %arg13 = %c0_i32 to %1 step %c1_i32  : i32 {
      %c1_i32_28 = arith.constant 1 : i32
      %52 = arith.muli %arg13, %c1_i32_28 : i32
      %c0_i32_29 = arith.constant 0 : i32
      %53 = arith.addi %c0_i32_29, %52 : i32
      %54 = arith.addi %0, %53 : i32
      %55 = arith.index_cast %54 : i32 to index
      %56 = memref.load %arg1[%55] : memref<256xi32, #tpu.memory_space<smem>>
      %c0_i32_30 = arith.constant 0 : i32
      %57 = tpu.memref_slice %arg4[%56, %c0_i32_30] : memref<512x128xf32, #tpu.memory_space<any>> -> memref<1x128xf32, #tpu.memory_space<any>>
      %c0_i32_31 = arith.constant 0 : i32
      %58 = tpu.memref_slice %arg10[%53, %c0_i32_31] : memref<64x128xf32, #tpu.memory_space<vmem>> -> memref<1x128xf32, #tpu.memory_space<vmem>>
      tpu.enqueue_dma source(%57 : memref<1x128xf32, #tpu.memory_space<any>>) target(%58 : memref<1x128xf32, #tpu.memory_space<vmem>>) target_semaphore(%arg12 : memref<!tpu.dma_semaphore, #tpu.memory_space<semaphore_mem>>)
      %59 = arith.addi %0, %53 : i32
      %60 = arith.index_cast %59 : i32 to index
      %61 = memref.load %arg2[%60] : memref<256xi32, #tpu.memory_space<smem>>
      %62 = arith.index_cast %61 : i32 to index
      %c0_32 = arith.constant 0 : index
      %63 = vector.load %arg5[%62, %c0_32] : memref<64x128xf32, #tpu.memory_space<vmem>>, vector<1x128xf32>
      %64 = vector.shape_cast %63 : vector<1x128xf32> to vector<128xf32>
      %65 = arith.index_cast %53 : i32 to index
      %c0_33 = arith.constant 0 : index
      %66 = vector.load %arg11[%65, %c0_33] : memref<64x128xf32, #tpu.memory_space<vmem>>, vector<1x128xf32>
      %67 = vector.shape_cast %66 : vector<1x128xf32> to vector<128xf32>
      %68 = vector.shape_cast %64 : vector<128xf32> to vector<1x128xf32>
      tpu.vector_store %arg11[%65, %c0_33], %68 {strides = array<i32>} : memref<64x128xf32, #tpu.memory_space<vmem>>, vector<1x128xf32>,
    }
    %c64_i32_1 = arith.constant 64 : i32
    %c0 = arith.constant 0 : index
    %c0_2 = arith.constant 0 : index
    %2 = vector.load %arg3[%c0, %c0_2] : memref<64x1xi32, #tpu.memory_space<vmem>>, vector<64x1xi32>
    %cst = arith.constant 0.000000e+00 : f32
    %3 = vector.broadcast %cst : f32 to vector<64x128xf32>
    %c0_3 = arith.constant 0 : index
    %c0_4 = arith.constant 0 : index
    %4 = vector.load %arg6[%c0_3, %c0_4] : memref<2x128xf32, #tpu.memory_space<vmem>>, vector<1x128xf32>
    %5 = vector.shape_cast %4 : vector<1x128xf32> to vector<1x128xf32>
    %6 = vector.broadcast %5 : vector<1x128xf32> to vector<64x128xf32>
    %c0_i32_5 = arith.constant 0 : i32
    %7 = vector.broadcast %c0_i32_5 : i32 to vector<64x1xi32>
    %8 = arith.cmpi eq, %2, %7 : vector<64x1xi32>
    %9 = vector.shape_cast %8 : vector<64x1xi1> to vector<64x1xi1>
    %10 = vector.broadcast %9 : vector<64x1xi1> to vector<64x128xi1>
    %11 = arith.select %10, %6, %3 : vector<64x128xi1>, vector<64x128xf32>
    %c1 = arith.constant 1 : index
    %c0_6 = arith.constant 0 : index
    %12 = vector.load %arg6[%c1, %c0_6] : memref<2x128xf32, #tpu.memory_space<vmem>>, vector<1x128xf32>
    %13 = vector.shape_cast %12 : vector<1x128xf32> to vector<1x128xf32>
    %14 = vector.broadcast %13 : vector<1x128xf32> to vector<64x128xf32>
    %c1_i32_7 = arith.constant 1 : i32
    %15 = vector.broadcast %c1_i32_7 : i32 to vector<64x1xi32>
    %16 = arith.cmpi eq, %2, %15 : vector<64x1xi32>
    %17 = vector.shape_cast %16 : vector<64x1xi1> to vector<64x1xi1>
    %18 = vector.broadcast %17 : vector<64x1xi1> to vector<64x128xi1>
    %19 = arith.select %18, %14, %11 : vector<64x128xi1>, vector<64x128xf32>
    %c0_i32_8 = arith.constant 0 : i32
    %c64_i32_9 = arith.constant 64 : i32
    %20 = arith.addi %c0_i32_8, %c64_i32_9 : i32
    %c1_i32_10 = arith.constant 1 : i32
    scf.for %arg13 = %c0_i32_8 to %20 step %c1_i32_10  : i32 {
      %c1_i32_28 = arith.constant 1 : i32
      %52 = arith.muli %arg13, %c1_i32_28 : i32
      %c0_i32_29 = arith.constant 0 : i32
      %53 = arith.addi %c0_i32_29, %52 : i32
      %c0_i32_30 = arith.constant 0 : i32
      %c0_i32_31 = arith.constant 0 : i32
      %54 = tpu.memref_slice %arg4[%c0_i32_30, %c0_i32_31] : memref<512x128xf32, #tpu.memory_space<any>> -> memref<1x128xf32, #tpu.memory_space<any>>
      %c0_i32_32 = arith.constant 0 : i32
      %55 = tpu.memref_slice %arg10[%53, %c0_i32_32] : memref<64x128xf32, #tpu.memory_space<vmem>> -> memref<1x128xf32, #tpu.memory_space<vmem>>
      tpu.wait_dma2 semaphore(%arg12 : memref<!tpu.dma_semaphore, #tpu.memory_space<semaphore_mem>>) src(%54 : memref<1x128xf32, #tpu.memory_space<any>>) dst(%55 : memref<1x128xf32, #tpu.memory_space<vmem>>)
    }
    %c64_i32_11 = arith.constant 64 : i32
    %c0_12 = arith.constant 0 : index
    %c0_13 = arith.constant 0 : index
    %21 = vector.load %arg10[%c0_12, %c0_13] : memref<64x128xf32, #tpu.memory_space<vmem>>, vector<64x128xf32>
    %c0_14 = arith.constant 0 : index
    %c0_15 = arith.constant 0 : index
    %22 = vector.load %arg11[%c0_14, %c0_15] : memref<64x128xf32, #tpu.memory_space<vmem>>, vector<64x128xf32>
    %23 = arith.addf %21, %22 : vector<64x128xf32>
    %24 = arith.addf %23, %19 : vector<64x128xf32>
    %cst_16 = arith.constant dense<0.000000e+00> : vector<64xf32>
    %25 = vector.multi_reduction <add>, %24, %cst_16 [1] : vector<64x128xf32> to vector<64xf32>
    %26 = vector.shape_cast %25 : vector<64xf32> to vector<64x1xf32>
    %27 = arith.mulf %24, %24 : vector<64x128xf32>
    %cst_17 = arith.constant dense<0.000000e+00> : vector<64xf32>
    %28 = vector.multi_reduction <add>, %27, %cst_17 [1] : vector<64x128xf32> to vector<64xf32>
    %29 = vector.shape_cast %28 : vector<64xf32> to vector<64x1xf32>
    %cst_18 = arith.constant 7.812500e-03 : f32
    %30 = vector.broadcast %cst_18 : f32 to vector<64x1xf32>
    %31 = arith.mulf %26, %30 : vector<64x1xf32>
    %cst_19 = arith.constant 7.812500e-03 : f32
    %32 = vector.broadcast %cst_19 : f32 to vector<64x1xf32>
    %33 = arith.mulf %29, %32 : vector<64x1xf32>
    %34 = arith.mulf %31, %31 : vector<64x1xf32>
    %35 = arith.subf %33, %34 : vector<64x1xf32>
    %cst_20 = arith.constant 0.000000e+00 : f32
    %36 = vector.broadcast %cst_20 : f32 to vector<64x1xf32>
    %37 = arith.maximumf %35, %36 : vector<64x1xf32>
    %cst_21 = arith.constant 9.99999974E-6 : f32
    %38 = vector.broadcast %cst_21 : f32 to vector<64x1xf32>
    %39 = arith.addf %37, %38 : vector<64x1xf32>
    %40 = math.rsqrt %39 : vector<64x1xf32>
    %41 = vector.broadcast %31 : vector<64x1xf32> to vector<64x128xf32>
    %42 = arith.subf %24, %41 : vector<64x128xf32>
    %43 = vector.broadcast %40 : vector<64x1xf32> to vector<64x128xf32>
    %44 = arith.mulf %42, %43 : vector<64x128xf32>
    %c0_22 = arith.constant 0 : index
    %c0_23 = arith.constant 0 : index
    %45 = vector.load %arg7[%c0_22, %c0_23] : memref<1x128xf32, #tpu.memory_space<vmem>>, vector<1x128xf32>
    %46 = vector.broadcast %45 : vector<1x128xf32> to vector<64x128xf32>
    %47 = arith.mulf %44, %46 : vector<64x128xf32>
    %c0_24 = arith.constant 0 : index
    %c0_25 = arith.constant 0 : index
    %48 = vector.load %arg8[%c0_24, %c0_25] : memref<1x128xf32, #tpu.memory_space<vmem>>, vector<1x128xf32>
    %49 = vector.broadcast %48 : vector<1x128xf32> to vector<64x128xf32>
    %50 = arith.addf %47, %49 : vector<64x128xf32>
    %c0_26 = arith.constant 0 : index
    %c0_27 = arith.constant 0 : index
    %51 = vector.load %arg9[%c0_26, %c0_27] : memref<64x128xf32, #tpu.memory_space<vmem>>, vector<64x128xf32>
    tpu.vector_store %arg9[%c0_26, %c0_27], %50 {strides = array<i32>} : memref<64x128xf32, #tpu.memory_space<vmem>>, vector<64x128xf32>,
    return
  }
  func.func @transform_0(%arg0: i32, %arg1: memref<256xi32, #tpu.memory_space<smem>>, %arg2: memref<256xi32, #tpu.memory_space<smem>>) -> (i32, i32) {
    %c0_i32 = arith.constant 0 : i32
    %c0_i32_0 = arith.constant 0 : i32
    return %arg0, %c0_i32 : i32, i32
  }
  func.func @transform_2(%arg0: i32, %arg1: memref<256xi32, #tpu.memory_space<smem>>, %arg2: memref<256xi32, #tpu.memory_space<smem>>) -> (i32, i32) {
    %c0_i32 = arith.constant 0 : i32
    %c0_i32_0 = arith.constant 0 : i32
    %c0_i32_1 = arith.constant 0 : i32
    return %c0_i32, %c0_i32_0 : i32, i32
  }
  func.func @transform_3(%arg0: i32, %arg1: memref<256xi32, #tpu.memory_space<smem>>, %arg2: memref<256xi32, #tpu.memory_space<smem>>) -> (i32, i32) {
    %c0_i32 = arith.constant 0 : i32
    %c0_i32_0 = arith.constant 0 : i32
    %c0_i32_1 = arith.constant 0 : i32
    return %c0_i32, %c0_i32_0 : i32, i32
  }
  func.func @transform_4(%arg0: i32, %arg1: memref<256xi32, #tpu.memory_space<smem>>, %arg2: memref<256xi32, #tpu.memory_space<smem>>) -> (i32, i32) {
    %c0_i32 = arith.constant 0 : i32
    %c0_i32_0 = arith.constant 0 : i32
    %c0_i32_1 = arith.constant 0 : i32
    return %c0_i32, %c0_i32_0 : i32, i32
  }
  func.func @transform_5(%arg0: i32, %arg1: memref<256xi32, #tpu.memory_space<smem>>, %arg2: memref<256xi32, #tpu.memory_space<smem>>) -> (i32, i32) {
    %c0_i32 = arith.constant 0 : i32
    %c0_i32_0 = arith.constant 0 : i32
    %c0_i32_1 = arith.constant 0 : i32
    return %c0_i32, %c0_i32_0 : i32, i32
  }
  func.func @transform_6(%arg0: i32, %arg1: memref<256xi32, #tpu.memory_space<smem>>, %arg2: memref<256xi32, #tpu.memory_space<smem>>) -> (i32, i32) {
    %c0_i32 = arith.constant 0 : i32
    %c0_i32_0 = arith.constant 0 : i32
    return %arg0, %c0_i32 : i32, i32
  }
}

</mosaic_0001>

<llo_original>
// kernel: tpu_custom_call.1
$region0: #{tpu_custom_call.1}
  #allocation0 [shape = 'u32[]', space=smem, size = 0x4, offset = 0x4, fixed_abs, tag = 'smem constant byte address 0x4 - core index']
  #allocation1 [shape = 'u32[72,128]{1,0:T(1,128)}', space=vmem, size = 0x9000, scoped, tag = 'internal scratch']
  #allocation2 [shape = 'f32[64,128]{1,0:T(8,128)}', space=vmem, size = 0x8000, scoped, tag = 'scratch operand']
  #allocation3 [shape = 'f32[64,128]{1,0:T(8,128)}', space=vmem, size = 0x8000, scoped, tag = 'scratch operand']
  #allocation4 [shape = 's32[1]{0}', space=sflag, size = 0x4, scoped, tag = 'scratch operand']
  #allocation5 [shape = 's32[1]{0}', space=sflag, size = 0x4, scoped, tag = 'scoped memory for tpu_custom_call.1']
  #allocation6 [shape = 'u8[1024]{0}', space=smem, size = 0x400, scoped, tag = 'prefetched SMEM operand 0']
  #allocation7 [shape = 'u8[1024]{0}', space=smem, size = 0x400, scoped, tag = 'prefetched SMEM operand 1']
  #allocation10 [shape = 's32[]', space=sflag, size = 0x4, offset = 0, fixed_abs, tag = 'sflag constant byte address 0x0 - dummy sync flag']
  #allocation11 [shape = 's32[]', space=sflag, size = 0x4, offset = 0, fixed_abs, tag = 'sflag constant byte address 0x0 - dummy sync flag']
  #allocation12 [shape = 'u32[]', space=smem, size = 0x4, offset = 0x44, fixed_abs, tag = 'smem constant byte address 0x44 - assertion arg 0']
  #allocation13 [shape = 'u32[]', space=smem, size = 0x4, offset = 0x48, fixed_abs, tag = 'smem constant byte address 0x48 - assertion arg 1']
  %s0 = inlined_call_operand.vmem [shape: s32[256], index: 0, kind: input, shape index: {}]
  %s1 = inlined_call_operand.vmem [shape: s32[256], index: 1, kind: input, shape index: {}]
  %s2 = inlined_call_operand.vmem [shape: s32[256,1], index: 2, kind: input, shape index: {}]
  %s3 = inlined_call_operand.hbm [shape: f32[512,128], index: 3, kind: input, shape index: {}]
  %s4 = inlined_call_operand.vmem [shape: f32[64,128], index: 4, kind: input, shape index: {}]
  %s5 = inlined_call_operand.vmem [shape: f32[2,128], index: 5, kind: input, shape index: {}]
  %s6 = inlined_call_operand.vmem [shape: f32[1,128], index: 6, kind: input, shape index: {}]
  %s7 = inlined_call_operand.vmem [shape: f32[1,128], index: 7, kind: input, shape index: {}]
  %s8 = inlined_call_operand.hbm [shape: f32[256,128], index: 8, kind: output, shape index: {}]
  %s9 = sld [smem:[#allocation0]]
  $region71: #{tpu_custom_call.1} parent=0
    _
  %s11 = ssub.s32 1, %s9
  %s12 = scalar_select 0, %s11, %s9
  %s14 = sshll.u32 %s0, 4
  %s15 = int_to_ptr.vmem [resolvable:$true] %s14
  %17 = dma.vmem_to_smem %s15, 32, [#allocation6], [#allocation5]
  %s19 = sshll.u32 %s1, 4
  %s20 = int_to_ptr.vmem [resolvable:$true] %s19
  %22 = dma.vmem_to_smem %s20, 32, [#allocation7], [#allocation5]
  %24 = dma.done [#allocation5], 64
  %25 = sfence
  $region1: #{tpu_custom_call.1} parent=0
    #allocation8 [shape = 'u8[65536]{0}', space=vmem, size = 0x10000, scoped, tag = 'output window, operand 0']
    #allocation9 [shape = 's32[2]{0}', space=sflag, size = 0x8, scoped, tag = 'scoped memory for tpu_custom_call.1']
    %26 = vsyncpa [#allocation9], 0
    %s27 = scalar_lea.sflag [#allocation9], 1
    %28 = vsyncpa %s27, 0
    loop: start=0, step=1, limit=6
    $region2: #{tpu_custom_call.1} parent=1 // loop_pre_header
      _
    $region3: #{tpu_custom_call.1} parent=1 // loop_header
      %s30 = sphi 0, %s34
      %p31 = scmp.ge.s32.totalorder %s30, 6
      %s40 = sphi 0, %s42
      %s43 = sphi 0, %s40
      %s44 = sphi 0, %s43
      %s60 = sphi 0, %s44
      %s64 = sphi 0, %s64
      %s66 = sphi 0, %s64
      %s67 = sphi 0, %s66
      %s81 = sphi 0, %s67
      %s85 = sphi 0, %s85
      %s87 = sphi 0, %s85
      %s88 = sphi 0, %s87
      %s102 = sphi 0, %s88
      %s106 = sphi 0, %s106
      %s108 = sphi 0, %s106
      %s109 = sphi 0, %s108
      %s123 = sphi 0, %s109
      %s127 = sphi 0, %s127
      %s129 = sphi 0, %s127
      %s130 = sphi 0, %s129
      %s144 = sphi 0, %s130
      %s150 = sphi 0, %s152
      %s153 = sphi 0, %s150
      %s154 = sphi 0, %s153
      %s170 = sphi 0, %s154
    $region4: #{tpu_custom_call.1} parent=1 // loop_header_branch
      %33 = sbr.rel (%p31) target = $region8
    $region5: #{tpu_custom_call.1} parent=1 // loop_body
      %s35 = ssub.s32 %s30, 1
      %s36 = ssub.s32 %s30, 2
      %s37 = sadd.s32 %s30, 1
      %s38 = ssub.s32 %s30, %s37
      %p39 = scmp.eq.s32.totalorder %s38, 0
      %s41 = sadd.s32 %s40, 1
      %s42 = scalar_select %p39, %s40, %s41
      %p45 = pneg %p39
      %p46 = scmp.eq.s32.totalorder %s30, 3
      %p47 = por %p45, %p46
      %p48 = scmp.ne.s32.totalorder %s40, %s43
      %p49 = scmp.eq.s32.totalorder %s30, 0
      %p50 = por %p48, %p49
      %p51 = scmp.ne.s32.totalorder %s40, %s43
      %p52 = scmp.eq.s32.totalorder %s35, 3
      %p53 = por %p51, %p52
      %p54 = scmp.ne.s32.totalorder %s43, %s44
      %p55 = scmp.eq.s32.totalorder %s35, 0
      %p56 = por %p54, %p55
      %p57 = scmp.ne.s32.totalorder %s43, %s44
      %p58 = scmp.eq.s32.totalorder %s36, 3
      %p59 = por %p57, %p58
      %p61 = scmp.ne.s32.totalorder %s44, %s60
      %p62 = scmp.eq.s32.totalorder %s36, 0
      %p63 = por %p61, %p62
      %s65 = sadd.s32 %s64, 1
      %p68 = scmp.eq.s32.totalorder %s30, 3
      %p69 = scmp.ne.s32.totalorder %s64, %s66
      %p70 = scmp.eq.s32.totalorder %s30, 0
      %p71 = por %p69, %p70
      %p72 = scmp.ne.s32.totalorder %s64, %s66
      %p73 = scmp.eq.s32.totalorder %s35, 3
      %p74 = por %p72, %p73
      %p75 = scmp.ne.s32.totalorder %s66, %s67
      %p76 = scmp.eq.s32.totalorder %s35, 0
      %p77 = por %p75, %p76
      %p78 = scmp.ne.s32.totalorder %s66, %s67
      %p79 = scmp.eq.s32.totalorder %s36, 3
      %p80 = por %p78, %p79
      %p82 = scmp.ne.s32.totalorder %s67, %s81
      %p83 = scmp.eq.s32.totalorder %s36, 0
      %p84 = por %p82, %p83
      %s86 = sadd.s32 %s85, 1
      %p89 = scmp.eq.s32.totalorder %s30, 3
      %p90 = scmp.ne.s32.totalorder %s85, %s87
      %p91 = scmp.eq.s32.totalorder %s30, 0
      %p92 = por %p90, %p91
      %p93 = scmp.ne.s32.totalorder %s85, %s87
      %p94 = scmp.eq.s32.totalorder %s35, 3
      %p95 = por %p93, %p94
      %p96 = scmp.ne.s32.totalorder %s87, %s88
      %p97 = scmp.eq.s32.totalorder %s35, 0
      %p98 = por %p96, %p97
      %p99 = scmp.ne.s32.totalorder %s87, %s88
      %p100 = scmp.eq.s32.totalorder %s36, 3
      %p101 = por %p99, %p100
      %p103 = scmp.ne.s32.totalorder %s88, %s102
      %p104 = scmp.eq.s32.totalorder %s36, 0
      %p105 = por %p103, %p104
      %s107 = sadd.s32 %s106, 1
      %p110 = scmp.eq.s32.totalorder %s30, 3
      %p111 = scmp.ne.s32.totalorder %s106, %s108
      %p112 = scmp.eq.s32.totalorder %s30, 0
      %p113 = por %p111, %p112
      %p114 = scmp.ne.s32.totalorder %s106, %s108
      %p115 = scmp.eq.s32.totalorder %s35, 3
      %p116 = por %p114, %p115
      %p117 = scmp.ne.s32.totalorder %s108, %s109
      %p118 = scmp.eq.s32.totalorder %s35, 0
      %p119 = por %p117, %p118
      %p120 = scmp.ne.s32.totalorder %s108, %s109
      %p121 = scmp.eq.s32.totalorder %s36, 3
      %p122 = por %p120, %p121
      %p124 = scmp.ne.s32.totalorder %s109, %s123
      %p125 = scmp.eq.s32.totalorder %s36, 0
      %p126 = por %p124, %p125
      %s128 = sadd.s32 %s127, 1
      %p131 = scmp.eq.s32.totalorder %s30, 3
      %p132 = scmp.ne.s32.totalorder %s127, %s129
      %p133 = scmp.eq.s32.totalorder %s30, 0
      %p134 = por %p132, %p133
      %p135 = scmp.ne.s32.totalorder %s127, %s129
      %p136 = scmp.eq.s32.totalorder %s35, 3
      %p137 = por %p135, %p136
      %p138 = scmp.ne.s32.totalorder %s129, %s130
      %p139 = scmp.eq.s32.totalorder %s35, 0
      %p140 = por %p138, %p139
      %p141 = scmp.ne.s32.totalorder %s129, %s130
      %p142 = scmp.eq.s32.totalorder %s36, 3
      %p143 = por %p141, %p142
      %p145 = scmp.ne.s32.totalorder %s130, %s144
      %p146 = scmp.eq.s32.totalorder %s36, 0
      %p147 = por %p145, %p146
      %s148 = ssub.s32 %s30, %s37
      %p149 = scmp.eq.s32.totalorder %s148, 0
      %s151 = sadd.s32 %s150, 1
      %s152 = scalar_select %p149, %s150, %s151
      %p155 = pneg %p149
      %p156 = scmp.eq.s32.totalorder %s30, 3
      %p157 = por %p155, %p156
      %p158 = scmp.ne.s32.totalorder %s150, %s153
      %p159 = scmp.eq.s32.totalorder %s30, 0
      %p160 = por %p158, %p159
      %p161 = scmp.ne.s32.totalorder %s150, %s153
      %p162 = scmp.eq.s32.totalorder %s35, 3
      %p163 = por %p161, %p162
      %p164 = scmp.ne.s32.totalorder %s153, %s154
      %p165 = scmp.eq.s32.totalorder %s35, 0
      %p166 = por %p164, %p165
      %p167 = scmp.ne.s32.totalorder %s153, %s154
      %p168 = scmp.eq.s32.totalorder %s36, 3
      %p169 = por %p167, %p168
      %p171 = scmp.ne.s32.totalorder %s154, %s170
      %p172 = scmp.eq.s32.totalorder %s36, 0
      %p173 = por %p171, %p172
      %p174 = scmp.le.s32.totalorder 1, %s30
      %p175 = scmp.lt.s32.totalorder %s30, 5
      %p176 = pnand %p174, %p175
      %p177 = pneg %p176
      // Predicated region
      $region9: #{tpu_custom_call.1} parent=5 // pred_check
        _
      $region10: #{tpu_custom_call.1} parent=5 // pred_check_branch
        %179 = sbr.rel (%p176) target = $region12
      $region11: #{tpu_custom_call.1} parent=5 // pred_region
        %s180 = ssub.s32 %s30, 1
        // Predicated region
        $region13: #{tpu_custom_call.1} parent=11 // pred_check
          %p181 = pneg %p77
        $region14: #{tpu_custom_call.1} parent=11 // pred_check_branch
          %183 = sbr.rel (%p181) target = $region16
        $region15: #{tpu_custom_call.1} parent=11 // pred_region
          _
        $region16: #{tpu_custom_call.1} parent=11 // pred_fallthru
          _
        // Predicated region
        $region17: #{tpu_custom_call.1} parent=11 // pred_check
          %p184 = pneg %p98
        $region18: #{tpu_custom_call.1} parent=11 // pred_check_branch
          %186 = sbr.rel (%p184) target = $region20
        $region19: #{tpu_custom_call.1} parent=11 // pred_region
          _
        $region20: #{tpu_custom_call.1} parent=11 // pred_fallthru
          _
        // Predicated region
        $region21: #{tpu_custom_call.1} parent=11 // pred_check
          %p187 = pneg %p119
        $region22: #{tpu_custom_call.1} parent=11 // pred_check_branch
          %189 = sbr.rel (%p187) target = $region24
        $region23: #{tpu_custom_call.1} parent=11 // pred_region
          _
        $region24: #{tpu_custom_call.1} parent=11 // pred_fallthru
          _
        // Predicated region
        $region25: #{tpu_custom_call.1} parent=11 // pred_check
          %p190 = pneg %p140
        $region26: #{tpu_custom_call.1} parent=11 // pred_check_branch
          %192 = sbr.rel (%p190) target = $region28
        $region27: #{tpu_custom_call.1} parent=11 // pred_region
          _
        $region28: #{tpu_custom_call.1} parent=11 // pred_fallthru
          _
      $region12: #{tpu_custom_call.1} parent=5 // pred_fallthru
        _
      %p193 = scmp.lt.s32.totalorder %s30, 4
      // Predicated region
      $region29: #{tpu_custom_call.1} parent=5 // pred_check
        %p194 = pneg %p193
      $region30: #{tpu_custom_call.1} parent=5 // pred_check_branch
        %196 = sbr.rel (%p194) target = $region32
      $region31: #{tpu_custom_call.1} parent=5 // pred_region
        // Predicated region
        $region33: #{tpu_custom_call.1} parent=31 // pred_check
          %p197 = pneg %p50
        $region34: #{tpu_custom_call.1} parent=31 // pred_check_branch
          %199 = sbr.rel (%p197) target = $region36
        $region35: #{tpu_custom_call.1} parent=31 // pred_region
          %s200 = smul.u32 8, %s30
          %p201 = scmp.lt.s32.totalorder %s200, 31
          %s202 = scalar_select %p201, %s200, 31
          %s203 = smul.addr %s202, 8
          %s204 = scalar_lea.vmem %s2, %s203
          %s205 = smul.u32 8, %s30
        $region36: #{tpu_custom_call.1} parent=31 // pred_fallthru
          _
      $region32: #{tpu_custom_call.1} parent=5 // pred_fallthru
        _
      %p206 = scmp.le.s32.totalorder 1, %s30
      %p207 = scmp.lt.s32.totalorder %s30, 5
      %p208 = pnand %p206, %p207
      %p209 = pneg %p208
      // Predicated region
      $region37: #{tpu_custom_call.1} parent=5 // pred_check
        _
      $region38: #{tpu_custom_call.1} parent=5 // pred_check_branch
        %211 = sbr.rel (%p208) target = $region40
      $region39: #{tpu_custom_call.1} parent=5 // pred_region
        %s212 = ssub.s32 %s30, 1
        %s213 = smul.u32 8, %s35
        %p214 = scmp.lt.s32.totalorder %s213, 31
        %s215 = scalar_select %p214, %s213, 31
        %s216 = smul.addr %s215, 8
        %s217 = scalar_lea.vmem %s2, %s216
        %p218 = pneg %p56
        %p219 = pneg %p53
        %p220 = pneg %p77
        %p221 = pneg %p74
        %p222 = pneg %p98
        %p223 = pneg %p95
        %p224 = pneg %p119
        %p225 = pneg %p116
        %p226 = pneg %p140
        %p227 = pneg %p137
        %p228 = pneg %p166
        %p229 = pneg %p163
        %s230 = sand.u32 %s153, 1
        %s231 = scalar_lea.sflag [#allocation9], %s230
        %s232 = sand.u32 %s153, 1
        %s233 = smul.addr %s232, 64
        %s234 = scalar_lea.vmem [#allocation8], %s233
        %s235 = smul.u32 8, %s35
        %p236 = scmp.lt.s32.totalorder %s235, 31
        %s237 = scalar_select %p236, %s235, 31
        %s238 = smul.addr %s237, 8
        %s239 = scalar_lea.vmem %s2, %s238
        %s240 = smul.u32 8, %s35
        %s241 = smul.u32 8, %s35
        %s242 = smul.u32 %s35, 64
        loop: start=0, step=1, limit=64
        $region41: #{tpu_custom_call.1} parent=39 // loop_pre_header
          _
        $region42: #{tpu_custom_call.1} parent=39 // loop_header
          %s244 = sphi 0, %s248
          %p245 = scmp.ge.s32.totalorder %s244, 64
        $region43: #{tpu_custom_call.1} parent=39 // loop_header_branch
          %247 = sbr.rel (%p245) target = $region47
        $region44: #{tpu_custom_call.1} parent=39 // loop_body
          %s249 = sadd.s32 %s242, %s244
          %s250 = sld [smem:[#allocation6 + %s249]]
          %s251 = scalar_lea.hbm %s3, %s250
          %s252 = scalar_lea.vmem [#allocation2], %s244
          // Predicated region
          $region48: #{tpu_custom_call.1} parent=44 // pred_check
            _
          $region49: #{tpu_custom_call.1} parent=44 // pred_check_branch
            %254 = sbr.rel target = $region51
          $region50: #{tpu_custom_call.1} parent=44 // pred_region
            %255 = sst [smem:[#allocation12]] [#allocation11]
            %256 = sst [smem:[#allocation13]] [#allocation10]
          $region51: #{tpu_custom_call.1} parent=44 // pred_fallthru
            _
          %258 = shalt.err (0)
          %s260 = sshll.u32 %s251, 4
          %s261 = int_to_ptr.hbm [resolvable:$true] %s260
          %s262 = sshll.u32 %s252, 4
          %s263 = int_to_ptr.vmem [resolvable:$true] %s262
          %265 = dma.hbm_to_vmem [thread:$0]  %s261, 16, %s263, [#allocation4]
          %s266 = sld [smem:[#allocation7 + %s249]]
          %s267 = scalar_lea.vmem %s4, %s266
          %v268 = vld [vmem:[%s267] sm:$0x1]
          %s269 = scalar_lea.vmem [#allocation3], %s244
          %270 = vst [vmem:[%s269] sm:$0x1] %v268
        $region45: #{tpu_custom_call.1} parent=39 // loop_footer
          %s248 = sadd.s32 1, %s244
        $region46: #{tpu_custom_call.1} parent=39 // loop_footer_branch
          %243 = sbr.rel target = $region42
        $region47: #{tpu_custom_call.1} parent=39 // loop_exit
          _
        %v271 = vld [vmem:[%s239] sm:$0xff]
        %v272 = vld [vmem:[%s239 + $0x8] sm:$0xff]
        %v273 = vld [vmem:[%s239 + $0x10] sm:$0xff]
        %v274 = vld [vmem:[%s239 + $0x18] sm:$0xff]
        %v275 = vld [vmem:[%s239 + $0x20] sm:$0xff]
        %v276 = vld [vmem:[%s239 + $0x28] sm:$0xff]
        %v277 = vld [vmem:[%s239 + $0x30] sm:$0xff]
        %v278 = vld [vmem:[%s239 + $0x38] sm:$0xff]
        %v279 = vld [vmem:[%s5] sm:$0x1]
        %v280 = vperm.slane %v279, 0
        %vm281 = vcmp.eq.s32.totalorder %v271, 0
        %vm282 = vcmp.eq.s32.totalorder %v272, 0
        %vm283 = vcmp.eq.s32.totalorder %v273, 0
        %vm284 = vcmp.eq.s32.totalorder %v274, 0
        %vm285 = vcmp.eq.s32.totalorder %v275, 0
        %vm286 = vcmp.eq.s32.totalorder %v276, 0
        %vm287 = vcmp.eq.s32.totalorder %v277, 0
        %vm288 = vcmp.eq.s32.totalorder %v278, 0
        %v289 = vsel %vm281, 1, 0
        %v290 = vsel %vm282, 1, 0
        %v291 = vsel %vm283, 1, 0
        %v292 = vsel %vm284, 1, 0
        %v293 = vsel %vm285, 1, 0
        %v294 = vsel %vm286, 1, 0
        %v295 = vsel %vm287, 1, 0
        %v296 = vsel %vm288, 1, 0
        %297 = vset.pattern.permute.xlu0 0
        %298 = vperm.xlu0 %297, %v289
        %v299 = vpop.permute.xlu0 %298
        %300 = vset.pattern.permute.xlu0 0
        %301 = vperm.xlu0 %300, %v290
        %v302 = vpop.permute.xlu0 %301
        %303 = vset.pattern.permute.xlu0 0
        %304 = vperm.xlu0 %303, %v291
        %v305 = vpop.permute.xlu0 %304
        %306 = vset.pattern.permute.xlu0 0
        %307 = vperm.xlu0 %306, %v292
        %v308 = vpop.permute.xlu0 %307
        %309 = vset.pattern.permute.xlu0 0
        %310 = vperm.xlu0 %309, %v293
        %v311 = vpop.permute.xlu0 %310
        %312 = vset.pattern.permute.xlu0 0
        %313 = vperm.xlu0 %312, %v294
        %v314 = vpop.permute.xlu0 %313
        %315 = vset.pattern.permute.xlu0 0
        %316 = vperm.xlu0 %315, %v295
        %v317 = vpop.permute.xlu0 %316
        %318 = vset.pattern.permute.xlu0 0
        %319 = vperm.xlu0 %318, %v296
        %v320 = vpop.permute.xlu0 %319
        %vm321 = vcmp.eq.s32.totalorder %v299, 1
        %vm322 = vcmp.eq.s32.totalorder %v302, 1
        %vm323 = vcmp.eq.s32.totalorder %v305, 1
        %vm324 = vcmp.eq.s32.totalorder %v308, 1
        %vm325 = vcmp.eq.s32.totalorder %v311, 1
        %vm326 = vcmp.eq.s32.totalorder %v314, 1
        %vm327 = vcmp.eq.s32.totalorder %v317, 1
        %vm328 = vcmp.eq.s32.totalorder %v320, 1
        %v329 = vsel %vm321, %v280, 0.0
        %v330 = vsel %vm322, %v280, 0.0
        %v331 = vsel %vm323, %v280, 0.0
        %v332 = vsel %vm324, %v280, 0.0
        %v333 = vsel %vm325, %v280, 0.0
        %v334 = vsel %vm326, %v280, 0.0
        %v335 = vsel %vm327, %v280, 0.0
        %v336 = vsel %vm328, %v280, 0.0
        %v337 = vld [vmem:[%s5 + $0x1] sm:$0x1]
        %v338 = vperm.slane %v337, 0
        %vm339 = vcmp.eq.s32.totalorder %v271, 1
        %vm340 = vcmp.eq.s32.totalorder %v272, 1
        %vm341 = vcmp.eq.s32.totalorder %v273, 1
        %vm342 = vcmp.eq.s32.totalorder %v274, 1
        %vm343 = vcmp.eq.s32.totalorder %v275, 1
        %vm344 = vcmp.eq.s32.totalorder %v276, 1
        %vm345 = vcmp.eq.s32.totalorder %v277, 1
        %vm346 = vcmp.eq.s32.totalorder %v278, 1
        %v347 = vsel %vm339, 1, 0
        %v348 = vsel %vm340, 1, 0
        %v349 = vsel %vm341, 1, 0
        %v350 = vsel %vm342, 1, 0
        %v351 = vsel %vm343, 1, 0
        %v352 = vsel %vm344, 1, 0
        %v353 = vsel %vm345, 1, 0
        %v354 = vsel %vm346, 1, 0
        %355 = vset.pattern.permute.xlu0 0
        %356 = vperm.xlu0 %355, %v347
        %v357 = vpop.permute.xlu0 %356
        %358 = vset.pattern.permute.xlu0 0
        %359 = vperm.xlu0 %358, %v348
        %v360 = vpop.permute.xlu0 %359
        %361 = vset.pattern.permute.xlu0 0
        %362 = vperm.xlu0 %361, %v349
        %v363 = vpop.permute.xlu0 %362
        %364 = vset.pattern.permute.xlu0 0
        %365 = vperm.xlu0 %364, %v350
        %v366 = vpop.permute.xlu0 %365
        %367 = vset.pattern.permute.xlu0 0
        %368 = vperm.xlu0 %367, %v351
        %v369 = vpop.permute.xlu0 %368
        %370 = vset.pattern.permute.xlu0 0
        %371 = vperm.xlu0 %370, %v352
        %v372 = vpop.permute.xlu0 %371
        %373 = vset.pattern.permute.xlu0 0
        %374 = vperm.xlu0 %373, %v353
        %v375 = vpop.permute.xlu0 %374
        %376 = vset.pattern.permute.xlu0 0
        %377 = vperm.xlu0 %376, %v354
        %v378 = vpop.permute.xlu0 %377
        %vm379 = vcmp.eq.s32.totalorder %v357, 1
        %vm380 = vcmp.eq.s32.totalorder %v360, 1
        %vm381 = vcmp.eq.s32.totalorder %v363, 1
        %vm382 = vcmp.eq.s32.totalorder %v366, 1
        %vm383 = vcmp.eq.s32.totalorder %v369, 1
        %vm384 = vcmp.eq.s32.totalorder %v372, 1
        %vm385 = vcmp.eq.s32.totalorder %v375, 1
        %vm386 = vcmp.eq.s32.totalorder %v378, 1
        %v387 = vsel %vm379, %v338, %v329
        %v388 = vsel %vm380, %v338, %v330
        %v389 = vsel %vm381, %v338, %v331
        %v390 = vsel %vm382, %v338, %v332
        %v391 = vsel %vm383, %v338, %v333
        %v392 = vsel %vm384, %v338, %v334
        %v393 = vsel %vm385, %v338, %v335
        %v394 = vsel %vm386, %v338, %v336
        loop: start=0, step=1, limit=64
        $region52: #{tpu_custom_call.1} parent=39 // loop_pre_header
          _
        $region53: #{tpu_custom_call.1} parent=39 // loop_header
          %s396 = sphi 0, %s400
          %p397 = scmp.ge.s32.totalorder %s396, 64
        $region54: #{tpu_custom_call.1} parent=39 // loop_header_branch
          %399 = sbr.rel (%p397) target = $region58
        $region55: #{tpu_custom_call.1} parent=39 // loop_body
          %s401 = smul.u32 1, 1
          %s402 = sshll.u32 %s401, 4
          %403 = dma.done [#allocation4], %s402
        $region56: #{tpu_custom_call.1} parent=39 // loop_footer
          %s400 = sadd.s32 1, %s396
        $region57: #{tpu_custom_call.1} parent=39 // loop_footer_branch
          %395 = sbr.rel target = $region53
        $region58: #{tpu_custom_call.1} parent=39 // loop_exit
          _
        %v404 = vld [vmem:[#allocation2] sm:$0xff]
        %v405 = vld [vmem:[#allocation2 + $0x8] sm:$0xff]
        %v406 = vld [vmem:[#allocation2 + $0x10] sm:$0xff]
        %v407 = vld [vmem:[#allocation2 + $0x18] sm:$0xff]
        %v408 = vld [vmem:[#allocation2 + $0x20] sm:$0xff]
        %v409 = vld [vmem:[#allocation2 + $0x28] sm:$0xff]
        %v410 = vld [vmem:[#allocation2 + $0x30] sm:$0xff]
        %v411 = vld [vmem:[#allocation2 + $0x38] sm:$0xff]
        %v412 = vld [vmem:[#allocation3] sm:$0xff]
        %v413 = vld [vmem:[#allocation3 + $0x8] sm:$0xff]
        %v414 = vld [vmem:[#allocation3 + $0x10] sm:$0xff]
        %v415 = vld [vmem:[#allocation3 + $0x18] sm:$0xff]
        %v416 = vld [vmem:[#allocation3 + $0x20] sm:$0xff]
        %v417 = vld [vmem:[#allocation3 + $0x28] sm:$0xff]
        %v418 = vld [vmem:[#allocation3 + $0x30] sm:$0xff]
        %v419 = vld [vmem:[#allocation3 + $0x38] sm:$0xff]
        %v420 = vadd.f32 %v404, %v412
        %v421 = vadd.f32 %v405, %v413
        %v422 = vadd.f32 %v406, %v414
        %v423 = vadd.f32 %v407, %v415
        %v424 = vadd.f32 %v408, %v416
        %v425 = vadd.f32 %v409, %v417
        %v426 = vadd.f32 %v410, %v418
        %v427 = vadd.f32 %v411, %v419
        %v428 = vadd.f32 %v420, %v387
        %v429 = vadd.f32 %v421, %v388
        %v430 = vadd.f32 %v422, %v389
        %v431 = vadd.f32 %v423, %v390
        %v432 = vadd.f32 %v424, %v391
        %v433 = vadd.f32 %v425, %v392
        %v434 = vadd.f32 %v426, %v393
        %v435 = vadd.f32 %v427, %v394
        %436 = vadd.xlane.f32.xlu0 %v428
        %v437 = vpop.xlane.xlu0 %436
        %438 = vadd.xlane.f32.xlu0 %v429
        %v439 = vpop.xlane.xlu0 %438
        %440 = vadd.xlane.f32.xlu0 %v430
        %v441 = vpop.xlane.xlu0 %440
        %442 = vadd.xlane.f32.xlu0 %v431
        %v443 = vpop.xlane.xlu0 %442
        %444 = vadd.xlane.f32.xlu0 %v432
        %v445 = vpop.xlane.xlu0 %444
        %446 = vadd.xlane.f32.xlu0 %v433
        %v447 = vpop.xlane.xlu0 %446
        %448 = vadd.xlane.f32.xlu0 %v434
        %v449 = vpop.xlane.xlu0 %448
        %450 = vadd.xlane.f32.xlu0 %v435
        %v451 = vpop.xlane.xlu0 %450
        %v452 = vmul.f32 %v428, %v428
        %v453 = vmul.f32 %v429, %v429
        %v454 = vmul.f32 %v430, %v430
        %v455 = vmul.f32 %v431, %v431
        %v456 = vmul.f32 %v432, %v432
        %v457 = vmul.f32 %v433, %v433
        %v458 = vmul.f32 %v434, %v434
        %v459 = vmul.f32 %v435, %v435
        %460 = vadd.xlane.f32.xlu0 %v452
        %v461 = vpop.xlane.xlu0 %460
        %462 = vadd.xlane.f32.xlu0 %v453
        %v463 = vpop.xlane.xlu0 %462
        %464 = vadd.xlane.f32.xlu0 %v454
        %v465 = vpop.xlane.xlu0 %464
        %466 = vadd.xlane.f32.xlu0 %v455
        %v467 = vpop.xlane.xlu0 %466
        %468 = vadd.xlane.f32.xlu0 %v456
        %v469 = vpop.xlane.xlu0 %468
        %470 = vadd.xlane.f32.xlu0 %v457
        %v471 = vpop.xlane.xlu0 %470
        %472 = vadd.xlane.f32.xlu0 %v458
        %v473 = vpop.xlane.xlu0 %472
        %474 = vadd.xlane.f32.xlu0 %v459
        %v475 = vpop.xlane.xlu0 %474
        %v476 = vmul.f32 %v437, 0.0078125
        %v477 = vmul.f32 %v439, 0.0078125
        %v478 = vmul.f32 %v441, 0.0078125
        %v479 = vmul.f32 %v443, 0.0078125
        %v480 = vmul.f32 %v445, 0.0078125
        %v481 = vmul.f32 %v447, 0.0078125
        %v482 = vmul.f32 %v449, 0.0078125
        %v483 = vmul.f32 %v451, 0.0078125
        %v484 = vmul.f32 %v461, 0.0078125
        %v485 = vmul.f32 %v463, 0.0078125
        %v486 = vmul.f32 %v465, 0.0078125
        %v487 = vmul.f32 %v467, 0.0078125
        %v488 = vmul.f32 %v469, 0.0078125
        %v489 = vmul.f32 %v471, 0.0078125
        %v490 = vmul.f32 %v473, 0.0078125
        %v491 = vmul.f32 %v475, 0.0078125
        %v492 = vmul.f32 %v476, %v476
        %v493 = vmul.f32 %v477, %v477
        %v494 = vmul.f32 %v478, %v478
        %v495 = vmul.f32 %v479, %v479
        %v496 = vmul.f32 %v480, %v480
        %v497 = vmul.f32 %v481, %v481
        %v498 = vmul.f32 %v482, %v482
        %v499 = vmul.f32 %v483, %v483
        %v500 = vsub.f32 %v484, %v492
        %v501 = vsub.f32 %v485, %v493
        %v502 = vsub.f32 %v486, %v494
        %v503 = vsub.f32 %v487, %v495
        %v504 = vsub.f32 %v488, %v496
        %v505 = vsub.f32 %v489, %v497
        %v506 = vsub.f32 %v490, %v498
        %v507 = vsub.f32 %v491, %v499
        %v508 = vmax.f32 %v500, 0.0
        %v509 = vmax.f32 %v501, 0.0
        %v510 = vmax.f32 %v502, 0.0
        %v511 = vmax.f32 %v503, 0.0
        %v512 = vmax.f32 %v504, 0.0
        %v513 = vmax.f32 %v505, 0.0
        %v514 = vmax.f32 %v506, 0.0
        %v515 = vmax.f32 %v507, 0.0
        %v516 = vadd.f32 %v508, 1e-05
        %v517 = vadd.f32 %v509, 1e-05
        %v518 = vadd.f32 %v510, 1e-05
        %v519 = vadd.f32 %v511, 1e-05
        %v520 = vadd.f32 %v512, 1e-05
        %v521 = vadd.f32 %v513, 1e-05
        %v522 = vadd.f32 %v514, 1e-05
        %v523 = vadd.f32 %v515, 1e-05
        %v524 = vrsqrt.pop %v516
        %v525 = vmul.f32 %v524, %v516
        %v526 = vmul.f32 %v525, %v524
        %v527 = vmul.f32 0.5, %v526
        %v528 = vsub.f32 1.5, %v527
        %v529 = vmul.f32 %v524, %v528
        %vm530 = vweird.f32 %v516
        %vm531 = vweird.f32 %v524
        %vm532 = vmor %vm530, %vm531
        %v533 = vsel %vm532, %v524, %v529
        %v534 = vrsqrt.pop %v517
        %v535 = vmul.f32 %v534, %v517
        %v536 = vmul.f32 %v535, %v534
        %v537 = vmul.f32 0.5, %v536
        %v538 = vsub.f32 1.5, %v537
        %v539 = vmul.f32 %v534, %v538
        %vm540 = vweird.f32 %v517
        %vm541 = vweird.f32 %v534
        %vm542 = vmor %vm540, %vm541
        %v543 = vsel %vm542, %v534, %v539
        %v544 = vrsqrt.pop %v518
        %v545 = vmul.f32 %v544, %v518
        %v546 = vmul.f32 %v545, %v544
        %v547 = vmul.f32 0.5, %v546
        %v548 = vsub.f32 1.5, %v547
        %v549 = vmul.f32 %v544, %v548
        %vm550 = vweird.f32 %v518
        %vm551 = vweird.f32 %v544
        %vm552 = vmor %vm550, %vm551
        %v553 = vsel %vm552, %v544, %v549
        %v554 = vrsqrt.pop %v519
        %v555 = vmul.f32 %v554, %v519
        %v556 = vmul.f32 %v555, %v554
        %v557 = vmul.f32 0.5, %v556
        %v558 = vsub.f32 1.5, %v557
        %v559 = vmul.f32 %v554, %v558
        %vm560 = vweird.f32 %v519
        %vm561 = vweird.f32 %v554
        %vm562 = vmor %vm560, %vm561
        %v563 = vsel %vm562, %v554, %v559
        %v564 = vrsqrt.pop %v520
        %v565 = vmul.f32 %v564, %v520
        %v566 = vmul.f32 %v565, %v564
        %v567 = vmul.f32 0.5, %v566
        %v568 = vsub.f32 1.5, %v567
        %v569 = vmul.f32 %v564, %v568
        %vm570 = vweird.f32 %v520
        %vm571 = vweird.f32 %v564
        %vm572 = vmor %vm570, %vm571
        %v573 = vsel %vm572, %v564, %v569
        %v574 = vrsqrt.pop %v521
        %v575 = vmul.f32 %v574, %v521
        %v576 = vmul.f32 %v575, %v574
        %v577 = vmul.f32 0.5, %v576
        %v578 = vsub.f32 1.5, %v577
        %v579 = vmul.f32 %v574, %v578
        %vm580 = vweird.f32 %v521
        %vm581 = vweird.f32 %v574
        %vm582 = vmor %vm580, %vm581
        %v583 = vsel %vm582, %v574, %v579
        %v584 = vrsqrt.pop %v522
        %v585 = vmul.f32 %v584, %v522
        %v586 = vmul.f32 %v585, %v584
        %v587 = vmul.f32 0.5, %v586
        %v588 = vsub.f32 1.5, %v587
        %v589 = vmul.f32 %v584, %v588
        %vm590 = vweird.f32 %v522
        %vm591 = vweird.f32 %v584
        %vm592 = vmor %vm590, %vm591
        %v593 = vsel %vm592, %v584, %v589
        %v594 = vrsqrt.pop %v523
        %v595 = vmul.f32 %v594, %v523
        %v596 = vmul.f32 %v595, %v594
        %v597 = vmul.f32 0.5, %v596
        %v598 = vsub.f32 1.5, %v597
        %v599 = vmul.f32 %v594, %v598
        %vm600 = vweird.f32 %v523
        %vm601 = vweird.f32 %v594
        %vm602 = vmor %vm600, %vm601
        %v603 = vsel %vm602, %v594, %v599
        %v604 = vsub.f32 %v428, %v476
        %v605 = vsub.f32 %v429, %v477
        %v606 = vsub.f32 %v430, %v478
        %v607 = vsub.f32 %v431, %v479
        %v608 = vsub.f32 %v432, %v480
        %v609 = vsub.f32 %v433, %v481
        %v610 = vsub.f32 %v434, %v482
        %v611 = vsub.f32 %v435, %v483
        %v612 = vmul.f32 %v604, %v533
        %v613 = vmul.f32 %v605, %v543
        %v614 = vmul.f32 %v606, %v553
        %v615 = vmul.f32 %v607, %v563
        %v616 = vmul.f32 %v608, %v573
        %v617 = vmul.f32 %v609, %v583
        %v618 = vmul.f32 %v610, %v593
        %v619 = vmul.f32 %v611, %v603
        %v620 = vld [vmem:[%s6] sm:$0x1]
        %v622 = vperm.slane %v620, 0
        %v624 = vmul.f32 %v612, %v622
        %v625 = vmul.f32 %v613, %v622
        %v626 = vmul.f32 %v614, %v622
        %v627 = vmul.f32 %v615, %v622
        %v628 = vmul.f32 %v616, %v622
        %v629 = vmul.f32 %v617, %v622
        %v630 = vmul.f32 %v618, %v622
        %v631 = vmul.f32 %v619, %v622
        %v632 = vld [vmem:[%s7] sm:$0x1]
        %v634 = vperm.slane %v632, 0
        %v636 = vadd.f32 %v624, %v634
        %v637 = vadd.f32 %v625, %v634
        %v638 = vadd.f32 %v626, %v634
        %v639 = vadd.f32 %v627, %v634
        %v640 = vadd.f32 %v628, %v634
        %v641 = vadd.f32 %v629, %v634
        %v642 = vadd.f32 %v630, %v634
        %v643 = vadd.f32 %v631, %v634
        %644 = vst [vmem:[%s234] sm:$0xff] %v636
        %645 = vst [vmem:[%s234 + $0x8] sm:$0xff] %v637
        %646 = vst [vmem:[%s234 + $0x10] sm:$0xff] %v638
        %647 = vst [vmem:[%s234 + $0x18] sm:$0xff] %v639
        %648 = vst [vmem:[%s234 + $0x20] sm:$0xff] %v640
        %649 = vst [vmem:[%s234 + $0x28] sm:$0xff] %v641
        %650 = vst [vmem:[%s234 + $0x30] sm:$0xff] %v642
        %651 = vst [vmem:[%s234 + $0x38] sm:$0xff] %v643
        %s652 = sand.u32 %s153, 1
        %s653 = scalar_lea.sflag [#allocation9], %s652
        %s654 = sand.u32 %s153, 1
        %s655 = smul.addr %s654, 64
        %s656 = scalar_lea.vmem [#allocation8], %s655
        // Predicated region
        $region59: #{tpu_custom_call.1} parent=39 // pred_check
          %p657 = pneg %p163
        $region60: #{tpu_custom_call.1} parent=39 // pred_check_branch
          %659 = sbr.rel (%p657) target = $region62
        $region61: #{tpu_custom_call.1} parent=39 // pred_region
          %s660 = smul.u32 8, %s35
          %662 = vsyncadd %s653, 0
          %s663 = smul.addr %s660, 8
          %s664 = scalar_lea.hbm %s8, %s663
          %s665 = sshll.u32 %s656, 4
          %s666 = int_to_ptr.vmem [resolvable:$true] %s665
          %s667 = sshll.u32 %s664, 4
          %s668 = int_to_ptr.hbm [resolvable:$true] %s667
          %673 = dma.vmem_to_hbm [thread:$0]  %s666, 1024, %s668, %s653, 128, 128, 8
        $region62: #{tpu_custom_call.1} parent=39 // pred_fallthru
          _
      $region40: #{tpu_custom_call.1} parent=5 // pred_fallthru
        _
      %p674 = scmp.le.s32.totalorder 2, %s30
      // Predicated region
      $region63: #{tpu_custom_call.1} parent=5 // pred_check
        %p675 = pneg %p674
      $region64: #{tpu_custom_call.1} parent=5 // pred_check_branch
        %677 = sbr.rel (%p675) target = $region66
      $region65: #{tpu_custom_call.1} parent=5 // pred_region
        %s678 = ssub.s32 %s30, 2
        // Predicated region
        $region67: #{tpu_custom_call.1} parent=65 // pred_check
          %p679 = pneg %p169
        $region68: #{tpu_custom_call.1} parent=65 // pred_check_branch
          %681 = sbr.rel (%p679) target = $region70
        $region69: #{tpu_custom_call.1} parent=65 // pred_region
          %s682 = sand.u32 %s154, 1
          %s683 = scalar_lea.sflag [#allocation9], %s682
          %s684 = sand.u32 %s154, 1
          %s685 = smul.addr %s684, 64
          %s686 = scalar_lea.vmem [#allocation8], %s685
          %688 = dma.done %s683, 1024
        $region70: #{tpu_custom_call.1} parent=65 // pred_fallthru
          _
      $region66: #{tpu_custom_call.1} parent=5 // pred_fallthru
        _
    $region6: #{tpu_custom_call.1} parent=1 // loop_footer
      %s34 = sadd.s32 1, %s30
    $region7: #{tpu_custom_call.1} parent=1 // loop_footer_branch
      %29 = sbr.rel target = $region3
    $region8: #{tpu_custom_call.1} parent=1 // loop_exit
      _
    %689 = vsyncpa [#allocation9], 1
    %s690 = scalar_lea.sflag [#allocation9], 1
    %691 = vsyncpa %s690, 1
  %692 = vsyncmov [#allocation4]
  %s693 = vpop.sfrf %692
  %p694 = scmp.eq.s32.totalorder %s693, 0
  %p695 = pneg %p694
  %697 = shalt.err (%p695)

</llo_original>
